<compile_context>
chip_gen: v7x
topology: tpu7x:2x2x1
jax: 0.10.0
libtpu: 0.0.40
codegen_flags: <defaults>
</compile_context>

<pallas_src>
import jax
import jax.numpy as jnp
from jax.experimental import pallas as pl
from jax.experimental.pallas import tpu as pltpu

SIZE_DIVISIBILITY = 32  # stand-in for self.backbone.size_divisibility


def _round_up(x, m):
    return ((x + m - 1) // m) * m


# ----------------------------------------------------------------------------
# Fused kernel: normalize (+fold of 1/std) + zero-pad + 1x1-conv stem + ReLU.
# One grid step per frame. Spatial dims are flattened (Hp*Wp on the lane axis).
# ----------------------------------------------------------------------------
def _fused_norm_pad_stem_kernel(img_ref, scale_ref, offmap_ref, w_ref, b_ref,
                                img_out_ref, feat_out_ref):
    # img_ref:     (1, C, Hp*Wp)  raw frame, zero-padded spatially, flattened
    # scale_ref:   (C, 1)         1 / pixel_std
    # offmap_ref:  (C, Hp*Wp)     -pixel_mean/pixel_std where valid, else 0
    # w_ref:       (F, C)         1x1-conv weights (transposed)
    # b_ref:       (F, 1)         1x1-conv bias
    # img_out_ref: (1, C, Hp*Wp)  normalized + zero-padded image
    # feat_out_ref:(1, F, Hp*Wp)  stem features (NCHW order when reshaped)
    C = img_ref.shape[1]

    x = img_ref[0]                                        # (C, HWp)

    # Normalization + ImageList "pad after norm" in a single FMA:
    #   valid region:  x/std - mean/std
    #   pad region:    0*scale + 0 = 0   (input pad is zero, offset map is zero)
    norm = x * scale_ref[...] + offmap_ref[...]           # (C, HWp)
    img_out_ref[0] = norm

    # 1x1-conv stem + ReLU: C broadcast FMAs on the VPU (K=C too small for the
    # MXU); output is already channel-major (NCHW when reshaped).
    acc = norm[0:1, :] * w_ref[:, 0:1]                    # (F, HWp)
    for c in range(1, C):
        acc = acc + norm[c:c + 1, :] * w_ref[:, c:c + 1]
    feat_out_ref[0] = jnp.maximum(acc + b_ref[...], 0.0)


def fused_preprocess_and_stem(images, pixel_mean, pixel_std, w_stem, b_stem):
    """Normalize+pad the T frames and run the 1x1-conv stem in one pallas_call."""
    T, C, H, W = images.shape
    F = w_stem.shape[1]
    Hp = _round_up(H, SIZE_DIVISIBILITY)
    Wp = _round_up(W, SIZE_DIVISIBILITY)
    HWp = Hp * Wp

    # Pad the raw frames once (cheap, tiny), flatten spatial dims onto lanes.
    imgs_p = jnp.pad(images.astype(jnp.float32),
                     ((0, 0), (0, 0), (0, Hp - H), (0, Wp - W)))
    imgs_flat = imgs_p.reshape(T, C, HWp)

    # Fold the normalizer into scale / offset (reciprocal precomputed once).
    scale = (1.0 / pixel_std).reshape(C, 1).astype(jnp.float32)
    offset = (-pixel_mean / pixel_std).reshape(C, 1).astype(jnp.float32)

    # Frame-invariant offset map: offset in the valid region, 0 in the pad
    # region.  Replaces the per-frame iota/mod/compare/select mask.
    row = jnp.arange(Hp, dtype=jnp.int32)[:, None]
    col = jnp.arange(Wp, dtype=jnp.int32)[None, :]
    valid = ((row < H) & (col < W)).reshape(1, HWp).astype(jnp.float32)
    offset_map = (offset * valid).astype(jnp.float32)     # (C, HWp)

    w_t = jnp.asarray(w_stem, jnp.float32).T              # (F, C)
    b = jnp.asarray(b_stem, jnp.float32).reshape(F, 1)    # (F, 1)

    img_flat, feat_flat = pl.pallas_call(
        _fused_norm_pad_stem_kernel,
        out_shape=(
            jax.ShapeDtypeStruct((T, C, HWp), jnp.float32),
            jax.ShapeDtypeStruct((T, F, HWp), jnp.float32),
        ),
        grid=(T,),
        in_specs=[
            pl.BlockSpec((1, C, HWp), lambda t: (t, 0, 0)),
            pl.BlockSpec((C, 1), lambda t: (0, 0)),
            pl.BlockSpec((C, HWp), lambda t: (0, 0)),
            pl.BlockSpec((F, C), lambda t: (0, 0)),
            pl.BlockSpec((F, 1), lambda t: (0, 0)),
        ],
        out_specs=(
            pl.BlockSpec((1, C, HWp), lambda t: (t, 0, 0)),
            pl.BlockSpec((1, F, HWp), lambda t: (t, 0, 0)),
        ),
        compiler_params=pltpu.CompilerParams(
            dimension_semantics=("parallel",)),
        cost_estimate=pl.CostEstimate(
            flops=2 * T * C * (1 + F) * HWp,
            transcendentals=0,
            bytes_accessed=4 * (2 * T * C * HWp + T * F * HWp
                                + C * HWp + F * C + F + C),
        ),
    )(imgs_flat, scale, offset_map, w_t, b)

    image_tensor = img_flat.reshape(T, C, Hp, Wp)
    features = {"stem": feat_flat.reshape(T, F, Hp, Wp)}
    return image_tensor, features


# ----------------------------------------------------------------------------
# forward (training path up to where registry-built submodules take over)
# ----------------------------------------------------------------------------
def to_st_features(features, num_frames):
    """Per-frame dict of per-level features, each with a leading batch dim 1."""
    st_features = []
    for f_idx in range(num_frames):
        lvl_features = {}
        for lvl in features:
            lvl_features[lvl] = features[lvl][f_idx][None]  # unsqueeze(0)
        st_features.append(lvl_features)
    return st_features


def st_rcnn_forward(images, params):
    """
    images: (T, C, H, W) float32 -- the T per-frame images of batched_inputs.
    Returns the padded/normalized image batch, backbone feature dict and the
    per-frame st_features list (the point at which proposal_generator /
    roi_heads -- external registry modules -- would consume them).
    """
    image_tensor, features = fused_preprocess_and_stem(
        images, params["pixel_mean"], params["pixel_std"],
        params["w_stem"], params["b_stem"])
    st_features = to_st_features(features, images.shape[0])
    # TODO(synk): tubelet proposal generation, ROI heads and losses live in
    #             external submodules and are not reproducible here.
    return image_tensor, features, st_features


if __name__ == "__main__":
    key = jax.random.PRNGKey(0)

    # cfg.MODEL.SPATIOTEMPORAL.* (small, forward-aggregation config)
    NUM_FRAMES = 1
    FORWARD_AGGREGATION = True
    num_frames = 2 * NUM_FRAMES + 1 if FORWARD_AGGREGATION else NUM_FRAMES

    C, H, W = 3, 16, 16
    F_STEM = 32

    # Deterministic parameters (cfg.MODEL.PIXEL_MEAN / PIXEL_STD).
    pixel_mean = jnp.array([123.675, 116.28, 103.53], dtype=jnp.float32)
    pixel_std = jnp.array([58.395, 57.12, 57.375], dtype=jnp.float32)

    k_img, k_w, k_b = jax.random.split(key, 3)
    images = jax.random.uniform(k_img, (num_frames, C, H, W),
                                dtype=jnp.float32, minval=0.0, maxval=255.0)
    params = {
        "pixel_mean": pixel_mean,
        "pixel_std": pixel_std,
        "w_stem": jax.random.normal(k_w, (C, F_STEM), jnp.float32) * 0.01,
        "b_stem": jax.random.normal(k_b, (1, F_STEM), jnp.float32) * 0.01,
    }

    image_tensor, features, st_features = st_rcnn_forward(images, params)
    jax.block_until_ready(image_tensor)
    jax.block_until_ready(features["stem"])

    # ---- plain-JAX reference of the translated path ----
    Hp = _round_up(H, SIZE_DIVISIBILITY)
    Wp = _round_up(W, SIZE_DIVISIBILITY)
    ref_norm = (images - pixel_mean[None, :, None, None]) / \
        pixel_std[None, :, None, None]
    ref_norm_p = jnp.pad(ref_norm, ((0, 0), (0, 0), (0, Hp - H), (0, Wp - W)))
    ref_feat = jnp.maximum(
        jnp.einsum("tchw,cf->tfhw", ref_norm_p, params["w_stem"])
        + params["b_stem"].reshape(1, F_STEM, 1, 1), 0.0)

    assert image_tensor.shape == (num_frames, C, Hp, Wp)
    assert jnp.allclose(image_tensor[:, :, :H, :W], ref_norm,
                        rtol=1e-5, atol=2e-5)
    # Padded region of the image tensor must be exactly zero (pad after norm).
    assert jnp.all(image_tensor[:, :, H:, :] == 0.0)
    assert jnp.all(image_tensor[:, :, :, W:] == 0.0)
    assert jnp.allclose(features["stem"], ref_feat, rtol=1e-5, atol=2e-5)
    assert st_features[0]["stem"].shape == (1, F_STEM, Hp, Wp)

    print("KERNEL_OK")
</pallas_src>

<mosaic_0001>
module attributes {stable_mosaic.version = 11 : i64} {
  func.func @_fused_norm_pad_stem_kernel(%arg0: i32, %arg1: memref<1x3x1024xf32, #tpu.memory_space<vmem>>, %arg2: memref<3x1xf32, #tpu.memory_space<vmem>>, %arg3: memref<3x1024xf32, #tpu.memory_space<vmem>>, %arg4: memref<32x3xf32, #tpu.memory_space<vmem>>, %arg5: memref<32x1xf32, #tpu.memory_space<vmem>>, %arg6: memref<1x3x1024xf32, #tpu.memory_space<vmem>>, %arg7: memref<1x32x1024xf32, #tpu.memory_space<vmem>>) attributes {dimension_semantics = [#tpu.dimension_semantics<parallel>], iteration_bounds = array<i64: 3>, scalar_prefetch = 0 : i64, scratch_operands = 0 : i64, tpu.core_type = #tpu.core_type<tc>, window_params = [{transform_indices = @transform_0, window_bounds = array<i64: 1, 3, 1024>}, {pipeline_mode = #tpu.pipeline_mode<synchronous>, transform_indices = @transform_1, window_bounds = array<i64: 3, 1>}, {pipeline_mode = #tpu.pipeline_mode<synchronous>, transform_indices = @transform_2, window_bounds = array<i64: 3, 1024>}, {pipeline_mode = #tpu.pipeline_mode<synchronous>, transform_indices = @transform_3, window_bounds = array<i64: 32, 3>}, {pipeline_mode = #tpu.pipeline_mode<synchronous>, transform_indices = @transform_4, window_bounds = array<i64: 32, 1>}, {transform_indices = @transform_5, window_bounds = array<i64: 1, 3, 1024>}, {transform_indices = @transform_6, window_bounds = array<i64: 1, 32, 1024>}]} {
    %c0 = arith.constant 0 : index
    %c0_0 = arith.constant 0 : index
    %c0_1 = arith.constant 0 : index
    %0 = vector.load %arg1[%c0, %c0_0, %c0_1] : memref<1x3x1024xf32, #tpu.memory_space<vmem>>, vector<1x3x1024xf32>
    %1 = vector.shape_cast %0 : vector<1x3x1024xf32> to vector<3x1024xf32>
    %c0_2 = arith.constant 0 : index
    %c0_3 = arith.constant 0 : index
    %2 = vector.load %arg2[%c0_2, %c0_3] : memref<3x1xf32, #tpu.memory_space<vmem>>, vector<3x1xf32>
    %3 = vector.broadcast %2 : vector<3x1xf32> to vector<3x1024xf32>
    %4 = arith.mulf %1, %3 : vector<3x1024xf32>
    %c0_4 = arith.constant 0 : index
    %c0_5 = arith.constant 0 : index
    %5 = vector.load %arg3[%c0_4, %c0_5] : memref<3x1024xf32, #tpu.memory_space<vmem>>, vector<3x1024xf32>
    %6 = arith.addf %4, %5 : vector<3x1024xf32>
    %c0_6 = arith.constant 0 : index
    %c0_7 = arith.constant 0 : index
    %c0_8 = arith.constant 0 : index
    %7 = vector.load %arg6[%c0_6, %c0_7, %c0_8] : memref<1x3x1024xf32, #tpu.memory_space<vmem>>, vector<1x3x1024xf32>
    %8 = vector.shape_cast %7 : vector<1x3x1024xf32> to vector<3x1024xf32>
    %9 = vector.shape_cast %6 : vector<3x1024xf32> to vector<1x3x1024xf32>
    tpu.vector_store %arg6[%c0_6, %c0_7, %c0_8], %9 {strides = array<i32>} : memref<1x3x1024xf32, #tpu.memory_space<vmem>>, vector<1x3x1024xf32>,
    %10 = vector.extract_strided_slice %6 {offsets = [0, 0], sizes = [1, 1024], strides = [1, 1]} : vector<3x1024xf32> to vector<1x1024xf32>
    %c0_9 = arith.constant 0 : index
    %c0_10 = arith.constant 0 : index
    %11 = vector.load %arg4[%c0_9, %c0_10] : memref<32x3xf32, #tpu.memory_space<vmem>>, vector<32x1xf32>
    %12 = vector.broadcast %10 : vector<1x1024xf32> to vector<32x1024xf32>
    %13 = vector.broadcast %11 : vector<32x1xf32> to vector<32x1024xf32>
    %14 = arith.mulf %12, %13 : vector<32x1024xf32>
    %15 = vector.extract_strided_slice %6 {offsets = [1, 0], sizes = [1, 1024], strides = [1, 1]} : vector<3x1024xf32> to vector<1x1024xf32>
    %c0_11 = arith.constant 0 : index
    %c1 = arith.constant 1 : index
    %16 = vector.load %arg4[%c0_11, %c1] : memref<32x3xf32, #tpu.memory_space<vmem>>, vector<32x1xf32>
    %17 = vector.broadcast %15 : vector<1x1024xf32> to vector<32x1024xf32>
    %18 = vector.broadcast %16 : vector<32x1xf32> to vector<32x1024xf32>
    %19 = arith.mulf %17, %18 : vector<32x1024xf32>
    %20 = arith.addf %14, %19 : vector<32x1024xf32>
    %21 = vector.extract_strided_slice %6 {offsets = [2, 0], sizes = [1, 1024], strides = [1, 1]} : vector<3x1024xf32> to vector<1x1024xf32>
    %c0_12 = arith.constant 0 : index
    %c2 = arith.constant 2 : index
    %22 = vector.load %arg4[%c0_12, %c2] : memref<32x3xf32, #tpu.memory_space<vmem>>, vector<32x1xf32>
    %23 = vector.broadcast %21 : vector<1x1024xf32> to vector<32x1024xf32>
    %24 = vector.broadcast %22 : vector<32x1xf32> to vector<32x1024xf32>
    %25 = arith.mulf %23, %24 : vector<32x1024xf32>
    %26 = arith.addf %20, %25 : vector<32x1024xf32>
    %c0_13 = arith.constant 0 : index
    %c0_14 = arith.constant 0 : index
    %27 = vector.load %arg5[%c0_13, %c0_14] : memref<32x1xf32, #tpu.memory_space<vmem>>, vector<32x1xf32>
    %28 = vector.broadcast %27 : vector<32x1xf32> to vector<32x1024xf32>
    %29 = arith.addf %26, %28 : vector<32x1024xf32>
    %cst = arith.constant 0.000000e+00 : f32
    %30 = vector.broadcast %cst : f32 to vector<32x1024xf32>
    %31 = arith.maximumf %29, %30 : vector<32x1024xf32>
    %c0_15 = arith.constant 0 : index
    %c0_16 = arith.constant 0 : index
    %c0_17 = arith.constant 0 : index
    %32 = vector.load %arg7[%c0_15, %c0_16, %c0_17] : memref<1x32x1024xf32, #tpu.memory_space<vmem>>, vector<1x32x1024xf32>
    %33 = vector.shape_cast %32 : vector<1x32x1024xf32> to vector<32x1024xf32>
    %34 = vector.shape_cast %31 : vector<32x1024xf32> to vector<1x32x1024xf32>
    tpu.vector_store %arg7[%c0_15, %c0_16, %c0_17], %34 {strides = array<i32>} : memref<1x32x1024xf32, #tpu.memory_space<vmem>>, vector<1x32x1024xf32>,
    return
  }
  func.func @transform_0(%arg0: i32) -> (i32, i32, i32) {
    %c0_i32 = arith.constant 0 : i32
    %c0_i32_0 = arith.constant 0 : i32
    %c0_i32_1 = arith.constant 0 : i32
    return %arg0, %c0_i32, %c0_i32_0 : i32, i32, i32
  }
  func.func @transform_1(%arg0: i32) -> (i32, i32) {
    %c0_i32 = arith.constant 0 : i32
    %c0_i32_0 = arith.constant 0 : i32
    %c0_i32_1 = arith.constant 0 : i32
    return %c0_i32, %c0_i32_0 : i32, i32
  }
  func.func @transform_2(%arg0: i32) -> (i32, i32) {
    %c0_i32 = arith.constant 0 : i32
    %c0_i32_0 = arith.constant 0 : i32
    %c0_i32_1 = arith.constant 0 : i32
    return %c0_i32, %c0_i32_0 : i32, i32
  }
  func.func @transform_3(%arg0: i32) -> (i32, i32) {
    %c0_i32 = arith.constant 0 : i32
    %c0_i32_0 = arith.constant 0 : i32
    %c0_i32_1 = arith.constant 0 : i32
    return %c0_i32, %c0_i32_0 : i32, i32
  }
  func.func @transform_4(%arg0: i32) -> (i32, i32) {
    %c0_i32 = arith.constant 0 : i32
    %c0_i32_0 = arith.constant 0 : i32
    %c0_i32_1 = arith.constant 0 : i32
    return %c0_i32, %c0_i32_0 : i32, i32
  }
  func.func @transform_5(%arg0: i32) -> (i32, i32, i32) {
    %c0_i32 = arith.constant 0 : i32
    %c0_i32_0 = arith.constant 0 : i32
    %c0_i32_1 = arith.constant 0 : i32
    return %arg0, %c0_i32, %c0_i32_0 : i32, i32, i32
  }
  func.func @transform_6(%arg0: i32) -> (i32, i32, i32) {
    %c0_i32 = arith.constant 0 : i32
    %c0_i32_0 = arith.constant 0 : i32
    %c0_i32_1 = arith.constant 0 : i32
    return %arg0, %c0_i32, %c0_i32_0 : i32, i32, i32
  }
}

</mosaic_0001>

<llo_original>
// kernel: tpu_custom_call.1
$region0: #{tpu_custom_call.1}
  #allocation0 [shape = 'u32[]', space=smem, size = 0x4, offset = 0x4, fixed_abs, tag = 'smem constant byte address 0x4 - core index']
  #allocation1 [shape = 'u32[144,128]{1,0:T(1,128)}', space=vmem, size = 0x12000, scoped, tag = 'internal scratch']
  %s0 = inlined_call_operand.hbm [shape: f32[3,3,1024], index: 0, kind: input, shape index: {}]
  %s1 = inlined_call_operand.vmem [shape: f32[3,1], index: 1, kind: input, shape index: {}]
  %s2 = inlined_call_operand.vmem [shape: f32[3,1024], index: 2, kind: input, shape index: {}]
  %s3 = inlined_call_operand.vmem [shape: f32[32,3], index: 3, kind: input, shape index: {}]
  %s4 = inlined_call_operand.vmem [shape: f32[32,1], index: 4, kind: input, shape index: {}]
  %s5 = inlined_call_operand.hbm [shape: f32[3,3,1024], index: 5, kind: output, shape index: {0}]
  %s6 = inlined_call_operand.hbm [shape: f32[3,32,1024], index: 6, kind: output, shape index: {1}]
  %7 = xla_tuple %s5, %s6
  %s8 = sld [smem:[#allocation0]]
  $region65: #{tpu_custom_call.1} parent=0
    _
  %s10 = ssub.s32 1, %s8
  %s11 = scalar_select 0, %s10, %s8
  $region1: #{tpu_custom_call.1} parent=0
    #allocation2 [shape = 'u8[32768]{0}', space=vmem, size = 0x8000, scoped, tag = 'input window, operand 0']
    #allocation3 [shape = 's32[2]{0}', space=sflag, size = 0x8, scoped, tag = 'scoped memory for tpu_custom_call.1']
    #allocation4 [shape = 's32[2]{0}', space=sflag, size = 0x8, scoped, tag = 'scoped memory for tpu_custom_call.1']
    #allocation5 [shape = 'u8[32768]{0}', space=vmem, size = 0x8000, scoped, tag = 'output window, operand 0']
    #allocation6 [shape = 'u8[262144]{0}', space=vmem, size = 0x40000, scoped, tag = 'output window, operand 1']
    #allocation7 [shape = 's32[2]{0}', space=sflag, size = 0x8, scoped, tag = 'scoped memory for tpu_custom_call.1']
    %12 = vsyncpa [#allocation3], 0
    %s13 = scalar_lea.sflag [#allocation3], 1
    %14 = vsyncpa %s13, 0
    %15 = vsyncpa [#allocation4], 0
    %s16 = scalar_lea.sflag [#allocation4], 1
    %17 = vsyncpa %s16, 0
    %18 = vsyncpa [#allocation7], 0
    %s19 = scalar_lea.sflag [#allocation7], 1
    %20 = vsyncpa %s19, 0
    loop: start=0, step=1, limit=5
    $region2: #{tpu_custom_call.1} parent=1 // loop_pre_header
      _
    $region3: #{tpu_custom_call.1} parent=1 // loop_header
      %s22 = sphi 0, %s26
      %p23 = scmp.ge.s32.totalorder %s22, 5
      %s32 = sphi 0, %s34
      %s35 = sphi 0, %s32
      %s36 = sphi 0, %s35
      %s52 = sphi 0, %s36
      %s56 = sphi 0, %s56
      %s58 = sphi 0, %s56
      %s59 = sphi 0, %s58
      %s73 = sphi 0, %s59
      %s77 = sphi 0, %s77
      %s79 = sphi 0, %s77
      %s80 = sphi 0, %s79
      %s94 = sphi 0, %s80
      %s98 = sphi 0, %s98
      %s100 = sphi 0, %s98
      %s101 = sphi 0, %s100
      %s115 = sphi 0, %s101
      %s119 = sphi 0, %s119
      %s121 = sphi 0, %s119
      %s122 = sphi 0, %s121
      %s136 = sphi 0, %s122
      %s142 = sphi 0, %s144
      %s145 = sphi 0, %s142
      %s146 = sphi 0, %s145
      %s162 = sphi 0, %s146
      %s168 = sphi 0, %s170
      %s171 = sphi 0, %s168
      %s172 = sphi 0, %s171
      %s188 = sphi 0, %s172
    $region4: #{tpu_custom_call.1} parent=1 // loop_header_branch
      %25 = sbr.rel (%p23) target = $region8
    $region5: #{tpu_custom_call.1} parent=1 // loop_body
      %s27 = ssub.s32 %s22, 1
      %s28 = ssub.s32 %s22, 2
      %s29 = sadd.s32 %s22, 1
      %s30 = ssub.s32 %s22, %s29
      %p31 = scmp.eq.s32.totalorder %s30, 0
      %s33 = sadd.s32 %s32, 1
      %s34 = scalar_select %p31, %s32, %s33
      %p37 = pneg %p31
      %p38 = scmp.eq.s32.totalorder %s22, 2
      %p39 = por %p37, %p38
      %p40 = scmp.ne.s32.totalorder %s32, %s35
      %p41 = scmp.eq.s32.totalorder %s22, 0
      %p42 = por %p40, %p41
      %p43 = scmp.ne.s32.totalorder %s32, %s35
      %p44 = scmp.eq.s32.totalorder %s27, 2
      %p45 = por %p43, %p44
      %p46 = scmp.ne.s32.totalorder %s35, %s36
      %p47 = scmp.eq.s32.totalorder %s27, 0
      %p48 = por %p46, %p47
      %p49 = scmp.ne.s32.totalorder %s35, %s36
      %p50 = scmp.eq.s32.totalorder %s28, 2
      %p51 = por %p49, %p50
      %p53 = scmp.ne.s32.totalorder %s36, %s52
      %p54 = scmp.eq.s32.totalorder %s28, 0
      %p55 = por %p53, %p54
      %s57 = sadd.s32 %s56, 1
      %p60 = scmp.eq.s32.totalorder %s22, 2
      %p61 = scmp.ne.s32.totalorder %s56, %s58
      %p62 = scmp.eq.s32.totalorder %s22, 0
      %p63 = por %p61, %p62
      %p64 = scmp.ne.s32.totalorder %s56, %s58
      %p65 = scmp.eq.s32.totalorder %s27, 2
      %p66 = por %p64, %p65
      %p67 = scmp.ne.s32.totalorder %s58, %s59
      %p68 = scmp.eq.s32.totalorder %s27, 0
      %p69 = por %p67, %p68
      %p70 = scmp.ne.s32.totalorder %s58, %s59
      %p71 = scmp.eq.s32.totalorder %s28, 2
      %p72 = por %p70, %p71
      %p74 = scmp.ne.s32.totalorder %s59, %s73
      %p75 = scmp.eq.s32.totalorder %s28, 0
      %p76 = por %p74, %p75
      %s78 = sadd.s32 %s77, 1
      %p81 = scmp.eq.s32.totalorder %s22, 2
      %p82 = scmp.ne.s32.totalorder %s77, %s79
      %p83 = scmp.eq.s32.totalorder %s22, 0
      %p84 = por %p82, %p83
      %p85 = scmp.ne.s32.totalorder %s77, %s79
      %p86 = scmp.eq.s32.totalorder %s27, 2
      %p87 = por %p85, %p86
      %p88 = scmp.ne.s32.totalorder %s79, %s80
      %p89 = scmp.eq.s32.totalorder %s27, 0
      %p90 = por %p88, %p89
      %p91 = scmp.ne.s32.totalorder %s79, %s80
      %p92 = scmp.eq.s32.totalorder %s28, 2
      %p93 = por %p91, %p92
      %p95 = scmp.ne.s32.totalorder %s80, %s94
      %p96 = scmp.eq.s32.totalorder %s28, 0
      %p97 = por %p95, %p96
      %s99 = sadd.s32 %s98, 1
      %p102 = scmp.eq.s32.totalorder %s22, 2
      %p103 = scmp.ne.s32.totalorder %s98, %s100
      %p104 = scmp.eq.s32.totalorder %s22, 0
      %p105 = por %p103, %p104
      %p106 = scmp.ne.s32.totalorder %s98, %s100
      %p107 = scmp.eq.s32.totalorder %s27, 2
      %p108 = por %p106, %p107
      %p109 = scmp.ne.s32.totalorder %s100, %s101
      %p110 = scmp.eq.s32.totalorder %s27, 0
      %p111 = por %p109, %p110
      %p112 = scmp.ne.s32.totalorder %s100, %s101
      %p113 = scmp.eq.s32.totalorder %s28, 2
      %p114 = por %p112, %p113
      %p116 = scmp.ne.s32.totalorder %s101, %s115
      %p117 = scmp.eq.s32.totalorder %s28, 0
      %p118 = por %p116, %p117
      %s120 = sadd.s32 %s119, 1
      %p123 = scmp.eq.s32.totalorder %s22, 2
      %p124 = scmp.ne.s32.totalorder %s119, %s121
      %p125 = scmp.eq.s32.totalorder %s22, 0
      %p126 = por %p124, %p125
      %p127 = scmp.ne.s32.totalorder %s119, %s121
      %p128 = scmp.eq.s32.totalorder %s27, 2
      %p129 = por %p127, %p128
      %p130 = scmp.ne.s32.totalorder %s121, %s122
      %p131 = scmp.eq.s32.totalorder %s27, 0
      %p132 = por %p130, %p131
      %p133 = scmp.ne.s32.totalorder %s121, %s122
      %p134 = scmp.eq.s32.totalorder %s28, 2
      %p135 = por %p133, %p134
      %p137 = scmp.ne.s32.totalorder %s122, %s136
      %p138 = scmp.eq.s32.totalorder %s28, 0
      %p139 = por %p137, %p138
      %s140 = ssub.s32 %s22, %s29
      %p141 = scmp.eq.s32.totalorder %s140, 0
      %s143 = sadd.s32 %s142, 1
      %s144 = scalar_select %p141, %s142, %s143
      %p147 = pneg %p141
      %p148 = scmp.eq.s32.totalorder %s22, 2
      %p149 = por %p147, %p148
      %p150 = scmp.ne.s32.totalorder %s142, %s145
      %p151 = scmp.eq.s32.totalorder %s22, 0
      %p152 = por %p150, %p151
      %p153 = scmp.ne.s32.totalorder %s142, %s145
      %p154 = scmp.eq.s32.totalorder %s27, 2
      %p155 = por %p153, %p154
      %p156 = scmp.ne.s32.totalorder %s145, %s146
      %p157 = scmp.eq.s32.totalorder %s27, 0
      %p158 = por %p156, %p157
      %p159 = scmp.ne.s32.totalorder %s145, %s146
      %p160 = scmp.eq.s32.totalorder %s28, 2
      %p161 = por %p159, %p160
      %p163 = scmp.ne.s32.totalorder %s146, %s162
      %p164 = scmp.eq.s32.totalorder %s28, 0
      %p165 = por %p163, %p164
      %s166 = ssub.s32 %s22, %s29
      %p167 = scmp.eq.s32.totalorder %s166, 0
      %s169 = sadd.s32 %s168, 1
      %s170 = scalar_select %p167, %s168, %s169
      %p173 = pneg %p167
      %p174 = scmp.eq.s32.totalorder %s22, 2
      %p175 = por %p173, %p174
      %p176 = scmp.ne.s32.totalorder %s168, %s171
      %p177 = scmp.eq.s32.totalorder %s22, 0
      %p178 = por %p176, %p177
      %p179 = scmp.ne.s32.totalorder %s168, %s171
      %p180 = scmp.eq.s32.totalorder %s27, 2
      %p181 = por %p179, %p180
      %p182 = scmp.ne.s32.totalorder %s171, %s172
      %p183 = scmp.eq.s32.totalorder %s27, 0
      %p184 = por %p182, %p183
      %p185 = scmp.ne.s32.totalorder %s171, %s172
      %p186 = scmp.eq.s32.totalorder %s28, 2
      %p187 = por %p185, %p186
      %p189 = scmp.ne.s32.totalorder %s172, %s188
      %p190 = scmp.eq.s32.totalorder %s28, 0
      %p191 = por %p189, %p190
      %p192 = scmp.le.s32.totalorder 1, %s22
      %p193 = scmp.lt.s32.totalorder %s22, 4
      %p194 = pnand %p192, %p193
      %p195 = pneg %p194
      // Predicated region
      $region9: #{tpu_custom_call.1} parent=5 // pred_check
        _
      $region10: #{tpu_custom_call.1} parent=5 // pred_check_branch
        %197 = sbr.rel (%p194) target = $region12
      $region11: #{tpu_custom_call.1} parent=5 // pred_region
        %s198 = ssub.s32 %s22, 1
        // Predicated region
        $region13: #{tpu_custom_call.1} parent=11 // pred_check
          %p199 = pneg %p69
        $region14: #{tpu_custom_call.1} parent=11 // pred_check_branch
          %201 = sbr.rel (%p199) target = $region16
        $region15: #{tpu_custom_call.1} parent=11 // pred_region
          _
        $region16: #{tpu_custom_call.1} parent=11 // pred_fallthru
          _
        // Predicated region
        $region17: #{tpu_custom_call.1} parent=11 // pred_check
          %p202 = pneg %p90
        $region18: #{tpu_custom_call.1} parent=11 // pred_check_branch
          %204 = sbr.rel (%p202) target = $region20
        $region19: #{tpu_custom_call.1} parent=11 // pred_region
          _
        $region20: #{tpu_custom_call.1} parent=11 // pred_fallthru
          _
        // Predicated region
        $region21: #{tpu_custom_call.1} parent=11 // pred_check
          %p205 = pneg %p111
        $region22: #{tpu_custom_call.1} parent=11 // pred_check_branch
          %207 = sbr.rel (%p205) target = $region24
        $region23: #{tpu_custom_call.1} parent=11 // pred_region
          _
        $region24: #{tpu_custom_call.1} parent=11 // pred_fallthru
          _
        // Predicated region
        $region25: #{tpu_custom_call.1} parent=11 // pred_check
          %p208 = pneg %p132
        $region26: #{tpu_custom_call.1} parent=11 // pred_check_branch
          %210 = sbr.rel (%p208) target = $region28
        $region27: #{tpu_custom_call.1} parent=11 // pred_region
          _
        $region28: #{tpu_custom_call.1} parent=11 // pred_fallthru
          _
      $region12: #{tpu_custom_call.1} parent=5 // pred_fallthru
        _
      %p211 = scmp.lt.s32.totalorder %s22, 3
      // Predicated region
      $region29: #{tpu_custom_call.1} parent=5 // pred_check
        %p212 = pneg %p211
      $region30: #{tpu_custom_call.1} parent=5 // pred_check_branch
        %214 = sbr.rel (%p212) target = $region32
      $region31: #{tpu_custom_call.1} parent=5 // pred_region
        // Predicated region
        $region33: #{tpu_custom_call.1} parent=31 // pred_check
          %p215 = pneg %p42
        $region34: #{tpu_custom_call.1} parent=31 // pred_check_branch
          %217 = sbr.rel (%p215) target = $region36
        $region35: #{tpu_custom_call.1} parent=31 // pred_region
          %s218 = sand.u32 %s32, 1
          %s219 = scalar_lea.sflag [#allocation3], %s218
          %s220 = sand.u32 %s32, 1
          %s221 = smul.addr %s220, 32
          %s222 = scalar_lea.vmem [#allocation2], %s221
          %s224 = ssub.s32 512, 512
          %225 = vsyncadd %s219, %s224
          %s226 = smul.addr %s22, 8
          %s227 = smul.addr %s226, 64
          %s228 = scalar_lea.hbm %s0, %s227
          %s230 = sshll.u32 %s222, 4
          %s231 = int_to_ptr.vmem [resolvable:$true] %s230
          %233 = dma.hbm_to_vmem [thread:$0]  %s228, 512, %s231, %s219
        $region36: #{tpu_custom_call.1} parent=31 // pred_fallthru
          _
      $region32: #{tpu_custom_call.1} parent=5 // pred_fallthru
        _
      %p234 = scmp.le.s32.totalorder 1, %s22
      %p235 = scmp.lt.s32.totalorder %s22, 4
      %p236 = pnand %p234, %p235
      %p237 = pneg %p236
      // Predicated region
      $region37: #{tpu_custom_call.1} parent=5 // pred_check
        _
      $region38: #{tpu_custom_call.1} parent=5 // pred_check_branch
        %239 = sbr.rel (%p236) target = $region40
      $region39: #{tpu_custom_call.1} parent=5 // pred_region
        %s240 = ssub.s32 %s22, 1
        %s241 = sand.u32 %s35, 1
        %s242 = scalar_lea.sflag [#allocation3], %s241
        %s243 = sand.u32 %s35, 1
        %s244 = smul.addr %s243, 32
        %s245 = scalar_lea.vmem [#allocation2], %s244
        // Predicated region
        $region41: #{tpu_custom_call.1} parent=39 // pred_check
          %p246 = pneg %p48
        $region42: #{tpu_custom_call.1} parent=39 // pred_check_branch
          %248 = sbr.rel (%p246) target = $region44
        $region43: #{tpu_custom_call.1} parent=39 // pred_region
          %249 = dma.done %s242, 512
        $region44: #{tpu_custom_call.1} parent=39 // pred_fallthru
          _
        %s250 = sand.u32 %s35, 1
        %s251 = scalar_lea.sflag [#allocation3], %s250
        %s252 = sand.u32 %s35, 1
        %s253 = smul.addr %s252, 32
        %s254 = scalar_lea.vmem [#allocation2], %s253
        %p255 = pneg %p48
        %p256 = pneg %p45
        %p257 = pneg %p69
        %p258 = pneg %p66
        %p259 = pneg %p90
        %p260 = pneg %p87
        %p261 = pneg %p111
        %p262 = pneg %p108
        %p263 = pneg %p132
        %p264 = pneg %p129
        %p265 = pneg %p158
        %p266 = pneg %p155
        %s267 = sand.u32 %s145, 1
        %s268 = scalar_lea.sflag [#allocation4], %s267
        %s269 = sand.u32 %s145, 1
        %s270 = smul.addr %s269, 32
        %s271 = scalar_lea.vmem [#allocation5], %s270
        %p272 = pneg %p184
        %p273 = pneg %p181
        %s274 = sand.u32 %s171, 1
        %s275 = scalar_lea.sflag [#allocation7], %s274
        %s276 = sand.u32 %s171, 1
        %s277 = smul.addr %s276, 256
        %s278 = scalar_lea.vmem [#allocation6], %s277
        %v279 = vld [vmem:[%s245] sm:$0x77]
        %v280 = vld [vmem:[%s245 + $0x8] sm:$0x77]
        %v281 = vld [vmem:[%s245 + $0x10] sm:$0x77]
        %v282 = vld [vmem:[%s245 + $0x18] sm:$0x77]
        %v283 = vld [vmem:[%s1] sm:$0x7]
        %285 = vset.pattern.permute.xlu0 0
        %286 = vperm.xlu0 %285, %v283
        %v287 = vpop.permute.xlu0 %286
        %v289 = vunpack.c.l.s4 839922192
        %v290 = vunpack.c.0.s8 %v289
        %v291 = vlaneseq
        %v292 = vshrl.u32 %v291, 7
        %v293 = vsub.s32 %v290, %v292
        %v294 = vrot.slane %v287, %v293
        %v296 = vmul.f32 %v279, %v294
        %v297 = vmul.f32 %v280, %v294
        %v298 = vmul.f32 %v281, %v294
        %v299 = vmul.f32 %v282, %v294
        %v300 = vld [vmem:[%s2] sm:$0x77]
        %v301 = vld [vmem:[%s2 + $0x8] sm:$0x77]
        %v302 = vld [vmem:[%s2 + $0x10] sm:$0x77]
        %v303 = vld [vmem:[%s2 + $0x18] sm:$0x77]
        %v304 = vadd.f32 %v296, %v300
        %v305 = vadd.f32 %v297, %v301
        %v306 = vadd.f32 %v298, %v302
        %v307 = vadd.f32 %v299, %v303
        %308 = vst [vmem:[%s271] sm:$0x77] %v304
        %309 = vst [vmem:[%s271 + $0x8] sm:$0x77] %v305
        %310 = vst [vmem:[%s271 + $0x10] sm:$0x77] %v306
        %311 = vst [vmem:[%s271 + $0x18] sm:$0x77] %v307
        %v312 = vld [vmem:[%s3] sm:$0xff]
        %v313 = vld [vmem:[%s3 + $0x8] sm:$0xff]
        %v314 = vld [vmem:[%s3 + $0x10] sm:$0xff]
        %v315 = vld [vmem:[%s3 + $0x18] sm:$0xff]
        %v320 = vlaneseq
        %v321 = vshrl.u32 %v320, 7
        %v322 = vsub.s32 0, %v321
        %v323 = vrot.slane %v304, %v322
        %v324 = vlaneseq
        %v325 = vshrl.u32 %v324, 7
        %v326 = vsub.s32 4, %v325
        %v327 = vrot.slane %v304, %v326
        %v328 = vlaneseq
        %v329 = vshrl.u32 %v328, 7
        %v330 = vsub.s32 0, %v329
        %v331 = vrot.slane %v305, %v330
        %v332 = vlaneseq
        %v333 = vshrl.u32 %v332, 7
        %v334 = vsub.s32 4, %v333
        %v335 = vrot.slane %v305, %v334
        %v336 = vlaneseq
        %v337 = vshrl.u32 %v336, 7
        %v338 = vsub.s32 0, %v337
        %v339 = vrot.slane %v306, %v338
        %v340 = vlaneseq
        %v341 = vshrl.u32 %v340, 7
        %v342 = vsub.s32 4, %v341
        %v343 = vrot.slane %v306, %v342
        %v344 = vlaneseq
        %v345 = vshrl.u32 %v344, 7
        %v346 = vsub.s32 0, %v345
        %v347 = vrot.slane %v307, %v346
        %v348 = vlaneseq
        %v349 = vshrl.u32 %v348, 7
        %v350 = vsub.s32 4, %v349
        %v351 = vrot.slane %v307, %v350
        %v360 = vlaneseq
        %v361 = vshrl.u32 %v360, 7
        %v362 = vsub.s32 0, %v361
        %v363 = vrot.slane %v323, %v362
        %v364 = vlaneseq
        %v365 = vshrl.u32 %v364, 7
        %v366 = vsub.s32 0, %v365
        %v367 = vrot.slane %v327, %v366
        %v368 = vlaneseq
        %v369 = vshrl.u32 %v368, 7
        %v370 = vsub.s32 0, %v369
        %v371 = vrot.slane %v331, %v370
        %v372 = vlaneseq
        %v373 = vshrl.u32 %v372, 7
        %v374 = vsub.s32 0, %v373
        %v375 = vrot.slane %v335, %v374
        %v376 = vlaneseq
        %v377 = vshrl.u32 %v376, 7
        %v378 = vsub.s32 0, %v377
        %v379 = vrot.slane %v339, %v378
        %v380 = vlaneseq
        %v381 = vshrl.u32 %v380, 7
        %v382 = vsub.s32 0, %v381
        %v383 = vrot.slane %v343, %v382
        %v384 = vlaneseq
        %v385 = vshrl.u32 %v384, 7
        %v386 = vsub.s32 0, %v385
        %v387 = vrot.slane %v347, %v386
        %v388 = vlaneseq
        %v389 = vshrl.u32 %v388, 7
        %v390 = vsub.s32 0, %v389
        %v391 = vrot.slane %v351, %v390
        %393 = vset.pattern.permute.xlu0 0
        %394 = vperm.xlu0 %393, %v312
        %v395 = vpop.permute.xlu0 %394
        %398 = vset.pattern.permute.xlu0 0
        %399 = vperm.xlu0 %398, %v313
        %v400 = vpop.permute.xlu0 %399
        %403 = vset.pattern.permute.xlu0 0
        %404 = vperm.xlu0 %403, %v314
        %v405 = vpop.permute.xlu0 %404
        %408 = vset.pattern.permute.xlu0 0
        %409 = vperm.xlu0 %408, %v315
        %v410 = vpop.permute.xlu0 %409
        %v412 = vmul.f32 %v363, %v395
        %v413 = vmul.f32 %v367, %v395
        %v414 = vmul.f32 %v371, %v395
        %v415 = vmul.f32 %v375, %v395
        %v416 = vmul.f32 %v379, %v395
        %v417 = vmul.f32 %v383, %v395
        %v418 = vmul.f32 %v387, %v395
        %v419 = vmul.f32 %v391, %v395
        %v420 = vmul.f32 %v363, %v400
        %v421 = vmul.f32 %v367, %v400
        %v422 = vmul.f32 %v371, %v400
        %v423 = vmul.f32 %v375, %v400
        %v424 = vmul.f32 %v379, %v400
        %v425 = vmul.f32 %v383, %v400
        %v426 = vmul.f32 %v387, %v400
        %v427 = vmul.f32 %v391, %v400
        %v428 = vmul.f32 %v363, %v405
        %v429 = vmul.f32 %v367, %v405
        %v430 = vmul.f32 %v371, %v405
        %v431 = vmul.f32 %v375, %v405
        %v432 = vmul.f32 %v379, %v405
        %v433 = vmul.f32 %v383, %v405
        %v434 = vmul.f32 %v387, %v405
        %v435 = vmul.f32 %v391, %v405
        %v436 = vmul.f32 %v363, %v410
        %v437 = vmul.f32 %v367, %v410
        %v438 = vmul.f32 %v371, %v410
        %v439 = vmul.f32 %v375, %v410
        %v440 = vmul.f32 %v379, %v410
        %v441 = vmul.f32 %v383, %v410
        %v442 = vmul.f32 %v387, %v410
        %v443 = vmul.f32 %v391, %v410
        %v444 = vlaneseq
        %v445 = vshrl.u32 %v444, 7
        %v446 = vsub.s32 1, %v445
        %v447 = vrot.slane %v304, %v446
        %v448 = vlaneseq
        %v449 = vshrl.u32 %v448, 7
        %v450 = vsub.s32 5, %v449
        %v451 = vrot.slane %v304, %v450
        %v452 = vlaneseq
        %v453 = vshrl.u32 %v452, 7
        %v454 = vsub.s32 1, %v453
        %v455 = vrot.slane %v305, %v454
        %v456 = vlaneseq
        %v457 = vshrl.u32 %v456, 7
        %v458 = vsub.s32 5, %v457
        %v459 = vrot.slane %v305, %v458
        %v460 = vlaneseq
        %v461 = vshrl.u32 %v460, 7
        %v462 = vsub.s32 1, %v461
        %v463 = vrot.slane %v306, %v462
        %v464 = vlaneseq
        %v465 = vshrl.u32 %v464, 7
        %v466 = vsub.s32 5, %v465
        %v467 = vrot.slane %v306, %v466
        %v468 = vlaneseq
        %v469 = vshrl.u32 %v468, 7
        %v470 = vsub.s32 1, %v469
        %v471 = vrot.slane %v307, %v470
        %v472 = vlaneseq
        %v473 = vshrl.u32 %v472, 7
        %v474 = vsub.s32 5, %v473
        %v475 = vrot.slane %v307, %v474
        %v484 = vlaneseq
        %v485 = vshrl.u32 %v484, 7
        %v486 = vsub.s32 1, %v485
        %v487 = vrot.slane %v447, %v486
        %v488 = vlaneseq
        %v489 = vshrl.u32 %v488, 7
        %v490 = vsub.s32 1, %v489
        %v491 = vrot.slane %v451, %v490
        %v492 = vlaneseq
        %v493 = vshrl.u32 %v492, 7
        %v494 = vsub.s32 1, %v493
        %v495 = vrot.slane %v455, %v494
        %v496 = vlaneseq
        %v497 = vshrl.u32 %v496, 7
        %v498 = vsub.s32 1, %v497
        %v499 = vrot.slane %v459, %v498
        %v500 = vlaneseq
        %v501 = vshrl.u32 %v500, 7
        %v502 = vsub.s32 1, %v501
        %v503 = vrot.slane %v463, %v502
        %v504 = vlaneseq
        %v505 = vshrl.u32 %v504, 7
        %v506 = vsub.s32 1, %v505
        %v507 = vrot.slane %v467, %v506
        %v508 = vlaneseq
        %v509 = vshrl.u32 %v508, 7
        %v510 = vsub.s32 1, %v509
        %v511 = vrot.slane %v471, %v510
        %v512 = vlaneseq
        %v513 = vshrl.u32 %v512, 7
        %v514 = vsub.s32 1, %v513
        %v515 = vrot.slane %v475, %v514
        %516 = vset.pattern.permute.xlu0 1
        %517 = vperm.xlu0 %516, %v312
        %v518 = vpop.permute.xlu0 %517
        %520 = vset.pattern.permute.xlu0 1
        %521 = vperm.xlu0 %520, %v313
        %v522 = vpop.permute.xlu0 %521
        %524 = vset.pattern.permute.xlu0 1
        %525 = vperm.xlu0 %524, %v314
        %v526 = vpop.permute.xlu0 %525
        %528 = vset.pattern.permute.xlu0 1
        %529 = vperm.xlu0 %528, %v315
        %v530 = vpop.permute.xlu0 %529
        %v532 = vmul.f32 %v487, %v518
        %v533 = vmul.f32 %v491, %v518
        %v534 = vmul.f32 %v495, %v518
        %v535 = vmul.f32 %v499, %v518
        %v536 = vmul.f32 %v503, %v518
        %v537 = vmul.f32 %v507, %v518
        %v538 = vmul.f32 %v511, %v518
        %v539 = vmul.f32 %v515, %v518
        %v540 = vmul.f32 %v487, %v522
        %v541 = vmul.f32 %v491, %v522
        %v542 = vmul.f32 %v495, %v522
        %v543 = vmul.f32 %v499, %v522
        %v544 = vmul.f32 %v503, %v522
        %v545 = vmul.f32 %v507, %v522
        %v546 = vmul.f32 %v511, %v522
        %v547 = vmul.f32 %v515, %v522
        %v548 = vmul.f32 %v487, %v526
        %v549 = vmul.f32 %v491, %v526
        %v550 = vmul.f32 %v495, %v526
        %v551 = vmul.f32 %v499, %v526
        %v552 = vmul.f32 %v503, %v526
        %v553 = vmul.f32 %v507, %v526
        %v554 = vmul.f32 %v511, %v526
        %v555 = vmul.f32 %v515, %v526
        %v556 = vmul.f32 %v487, %v530
        %v557 = vmul.f32 %v491, %v530
        %v558 = vmul.f32 %v495, %v530
        %v559 = vmul.f32 %v499, %v530
        %v560 = vmul.f32 %v503, %v530
        %v561 = vmul.f32 %v507, %v530
        %v562 = vmul.f32 %v511, %v530
        %v563 = vmul.f32 %v515, %v530
        %v564 = vadd.f32 %v412, %v532
        %v565 = vadd.f32 %v413, %v533
        %v566 = vadd.f32 %v414, %v534
        %v567 = vadd.f32 %v415, %v535
        %v568 = vadd.f32 %v416, %v536
        %v569 = vadd.f32 %v417, %v537
        %v570 = vadd.f32 %v418, %v538
        %v571 = vadd.f32 %v419, %v539
        %v572 = vadd.f32 %v420, %v540
        %v573 = vadd.f32 %v421, %v541
        %v574 = vadd.f32 %v422, %v542
        %v575 = vadd.f32 %v423, %v543
        %v576 = vadd.f32 %v424, %v544
        %v577 = vadd.f32 %v425, %v545
        %v578 = vadd.f32 %v426, %v546
        %v579 = vadd.f32 %v427, %v547
        %v580 = vadd.f32 %v428, %v548
        %v581 = vadd.f32 %v429, %v549
        %v582 = vadd.f32 %v430, %v550
        %v583 = vadd.f32 %v431, %v551
        %v584 = vadd.f32 %v432, %v552
        %v585 = vadd.f32 %v433, %v553
        %v586 = vadd.f32 %v434, %v554
        %v587 = vadd.f32 %v435, %v555
        %v588 = vadd.f32 %v436, %v556
        %v589 = vadd.f32 %v437, %v557
        %v590 = vadd.f32 %v438, %v558
        %v591 = vadd.f32 %v439, %v559
        %v592 = vadd.f32 %v440, %v560
        %v593 = vadd.f32 %v441, %v561
        %v594 = vadd.f32 %v442, %v562
        %v595 = vadd.f32 %v443, %v563
        %v596 = vlaneseq
        %v597 = vshrl.u32 %v596, 7
        %v598 = vsub.s32 2, %v597
        %v599 = vrot.slane %v304, %v598
        %v600 = vlaneseq
        %v601 = vshrl.u32 %v600, 7
        %v602 = vsub.s32 6, %v601
        %v603 = vrot.slane %v304, %v602
        %v604 = vlaneseq
        %v605 = vshrl.u32 %v604, 7
        %v606 = vsub.s32 2, %v605
        %v607 = vrot.slane %v305, %v606
        %v608 = vlaneseq
        %v609 = vshrl.u32 %v608, 7
        %v610 = vsub.s32 6, %v609
        %v611 = vrot.slane %v305, %v610
        %v612 = vlaneseq
        %v613 = vshrl.u32 %v612, 7
        %v614 = vsub.s32 2, %v613
        %v615 = vrot.slane %v306, %v614
        %v616 = vlaneseq
        %v617 = vshrl.u32 %v616, 7
        %v618 = vsub.s32 6, %v617
        %v619 = vrot.slane %v306, %v618
        %v620 = vlaneseq
        %v621 = vshrl.u32 %v620, 7
        %v622 = vsub.s32 2, %v621
        %v623 = vrot.slane %v307, %v622
        %v624 = vlaneseq
        %v625 = vshrl.u32 %v624, 7
        %v626 = vsub.s32 6, %v625
        %v627 = vrot.slane %v307, %v626
        %v636 = vlaneseq
        %v637 = vshrl.u32 %v636, 7
        %v638 = vsub.s32 2, %v637
        %v639 = vrot.slane %v599, %v638
        %v640 = vlaneseq
        %v641 = vshrl.u32 %v640, 7
        %v642 = vsub.s32 2, %v641
        %v643 = vrot.slane %v603, %v642
        %v644 = vlaneseq
        %v645 = vshrl.u32 %v644, 7
        %v646 = vsub.s32 2, %v645
        %v647 = vrot.slane %v607, %v646
        %v648 = vlaneseq
        %v649 = vshrl.u32 %v648, 7
        %v650 = vsub.s32 2, %v649
        %v651 = vrot.slane %v611, %v650
        %v652 = vlaneseq
        %v653 = vshrl.u32 %v652, 7
        %v654 = vsub.s32 2, %v653
        %v655 = vrot.slane %v615, %v654
        %v656 = vlaneseq
        %v657 = vshrl.u32 %v656, 7
        %v658 = vsub.s32 2, %v657
        %v659 = vrot.slane %v619, %v658
        %v660 = vlaneseq
        %v661 = vshrl.u32 %v660, 7
        %v662 = vsub.s32 2, %v661
        %v663 = vrot.slane %v623, %v662
        %v664 = vlaneseq
        %v665 = vshrl.u32 %v664, 7
        %v666 = vsub.s32 2, %v665
        %v667 = vrot.slane %v627, %v666
        %668 = vset.pattern.permute.xlu0 2
        %669 = vperm.xlu0 %668, %v312
        %v670 = vpop.permute.xlu0 %669
        %672 = vset.pattern.permute.xlu0 2
        %673 = vperm.xlu0 %672, %v313
        %v674 = vpop.permute.xlu0 %673
        %676 = vset.pattern.permute.xlu0 2
        %677 = vperm.xlu0 %676, %v314
        %v678 = vpop.permute.xlu0 %677
        %680 = vset.pattern.permute.xlu0 2
        %681 = vperm.xlu0 %680, %v315
        %v682 = vpop.permute.xlu0 %681
        %v684 = vmul.f32 %v639, %v670
        %v685 = vmul.f32 %v643, %v670
        %v686 = vmul.f32 %v647, %v670
        %v687 = vmul.f32 %v651, %v670
        %v688 = vmul.f32 %v655, %v670
        %v689 = vmul.f32 %v659, %v670
        %v690 = vmul.f32 %v663, %v670
        %v691 = vmul.f32 %v667, %v670
        %v692 = vmul.f32 %v639, %v674
        %v693 = vmul.f32 %v643, %v674
        %v694 = vmul.f32 %v647, %v674
        %v695 = vmul.f32 %v651, %v674
        %v696 = vmul.f32 %v655, %v674
        %v697 = vmul.f32 %v659, %v674
        %v698 = vmul.f32 %v663, %v674
        %v699 = vmul.f32 %v667, %v674
        %v700 = vmul.f32 %v639, %v678
        %v701 = vmul.f32 %v643, %v678
        %v702 = vmul.f32 %v647, %v678
        %v703 = vmul.f32 %v651, %v678
        %v704 = vmul.f32 %v655, %v678
        %v705 = vmul.f32 %v659, %v678
        %v706 = vmul.f32 %v663, %v678
        %v707 = vmul.f32 %v667, %v678
        %v708 = vmul.f32 %v639, %v682
        %v709 = vmul.f32 %v643, %v682
        %v710 = vmul.f32 %v647, %v682
        %v711 = vmul.f32 %v651, %v682
        %v712 = vmul.f32 %v655, %v682
        %v713 = vmul.f32 %v659, %v682
        %v714 = vmul.f32 %v663, %v682
        %v715 = vmul.f32 %v667, %v682
        %v716 = vadd.f32 %v564, %v684
        %v717 = vadd.f32 %v565, %v685
        %v718 = vadd.f32 %v566, %v686
        %v719 = vadd.f32 %v567, %v687
        %v720 = vadd.f32 %v568, %v688
        %v721 = vadd.f32 %v569, %v689
        %v722 = vadd.f32 %v570, %v690
        %v723 = vadd.f32 %v571, %v691
        %v724 = vadd.f32 %v572, %v692
        %v725 = vadd.f32 %v573, %v693
        %v726 = vadd.f32 %v574, %v694
        %v727 = vadd.f32 %v575, %v695
        %v728 = vadd.f32 %v576, %v696
        %v729 = vadd.f32 %v577, %v697
        %v730 = vadd.f32 %v578, %v698
        %v731 = vadd.f32 %v579, %v699
        %v732 = vadd.f32 %v580, %v700
        %v733 = vadd.f32 %v581, %v701
        %v734 = vadd.f32 %v582, %v702
        %v735 = vadd.f32 %v583, %v703
        %v736 = vadd.f32 %v584, %v704
        %v737 = vadd.f32 %v585, %v705
        %v738 = vadd.f32 %v586, %v706
        %v739 = vadd.f32 %v587, %v707
        %v740 = vadd.f32 %v588, %v708
        %v741 = vadd.f32 %v589, %v709
        %v742 = vadd.f32 %v590, %v710
        %v743 = vadd.f32 %v591, %v711
        %v744 = vadd.f32 %v592, %v712
        %v745 = vadd.f32 %v593, %v713
        %v746 = vadd.f32 %v594, %v714
        %v747 = vadd.f32 %v595, %v715
        %v748 = vld [vmem:[%s4] sm:$0xff]
        %v749 = vld [vmem:[%s4 + $0x8] sm:$0xff]
        %v750 = vld [vmem:[%s4 + $0x10] sm:$0xff]
        %v751 = vld [vmem:[%s4 + $0x18] sm:$0xff]
        %753 = vset.pattern.permute.xlu0 0
        %754 = vperm.xlu0 %753, %v748
        %v755 = vpop.permute.xlu0 %754
        %758 = vset.pattern.permute.xlu0 0
        %759 = vperm.xlu0 %758, %v749
        %v760 = vpop.permute.xlu0 %759
        %763 = vset.pattern.permute.xlu0 0
        %764 = vperm.xlu0 %763, %v750
        %v765 = vpop.permute.xlu0 %764
        %768 = vset.pattern.permute.xlu0 0
        %769 = vperm.xlu0 %768, %v751
        %v770 = vpop.permute.xlu0 %769
        %v772 = vadd.f32 %v716, %v755
        %v773 = vadd.f32 %v717, %v755
        %v774 = vadd.f32 %v718, %v755
        %v775 = vadd.f32 %v719, %v755
        %v776 = vadd.f32 %v720, %v755
        %v777 = vadd.f32 %v721, %v755
        %v778 = vadd.f32 %v722, %v755
        %v779 = vadd.f32 %v723, %v755
        %v780 = vadd.f32 %v724, %v760
        %v781 = vadd.f32 %v725, %v760
        %v782 = vadd.f32 %v726, %v760
        %v783 = vadd.f32 %v727, %v760
        %v784 = vadd.f32 %v728, %v760
        %v785 = vadd.f32 %v729, %v760
        %v786 = vadd.f32 %v730, %v760
        %v787 = vadd.f32 %v731, %v760
        %v788 = vadd.f32 %v732, %v765
        %v789 = vadd.f32 %v733, %v765
        %v790 = vadd.f32 %v734, %v765
        %v791 = vadd.f32 %v735, %v765
        %v792 = vadd.f32 %v736, %v765
        %v793 = vadd.f32 %v737, %v765
        %v794 = vadd.f32 %v738, %v765
        %v795 = vadd.f32 %v739, %v765
        %v796 = vadd.f32 %v740, %v770
        %v797 = vadd.f32 %v741, %v770
        %v798 = vadd.f32 %v742, %v770
        %v799 = vadd.f32 %v743, %v770
        %v800 = vadd.f32 %v744, %v770
        %v801 = vadd.f32 %v745, %v770
        %v802 = vadd.f32 %v746, %v770
        %v803 = vadd.f32 %v747, %v770
        %v804 = vmax.f32 %v772, 0.0
        %v805 = vmax.f32 %v773, 0.0
        %v806 = vmax.f32 %v774, 0.0
        %v807 = vmax.f32 %v775, 0.0
        %v808 = vmax.f32 %v776, 0.0
        %v809 = vmax.f32 %v777, 0.0
        %v810 = vmax.f32 %v778, 0.0
        %v811 = vmax.f32 %v779, 0.0
        %v812 = vmax.f32 %v780, 0.0
        %v813 = vmax.f32 %v781, 0.0
        %v814 = vmax.f32 %v782, 0.0
        %v815 = vmax.f32 %v783, 0.0
        %v816 = vmax.f32 %v784, 0.0
        %v817 = vmax.f32 %v785, 0.0
        %v818 = vmax.f32 %v786, 0.0
        %v819 = vmax.f32 %v787, 0.0
        %v820 = vmax.f32 %v788, 0.0
        %v821 = vmax.f32 %v789, 0.0
        %v822 = vmax.f32 %v790, 0.0
        %v823 = vmax.f32 %v791, 0.0
        %v824 = vmax.f32 %v792, 0.0
        %v825 = vmax.f32 %v793, 0.0
        %v826 = vmax.f32 %v794, 0.0
        %v827 = vmax.f32 %v795, 0.0
        %v828 = vmax.f32 %v796, 0.0
        %v829 = vmax.f32 %v797, 0.0
        %v830 = vmax.f32 %v798, 0.0
        %v831 = vmax.f32 %v799, 0.0
        %v832 = vmax.f32 %v800, 0.0
        %v833 = vmax.f32 %v801, 0.0
        %v834 = vmax.f32 %v802, 0.0
        %v835 = vmax.f32 %v803, 0.0
        %836 = vst [vmem:[%s278] sm:$0xff] %v804
        %837 = vst [vmem:[%s278 + $0x8] sm:$0xff] %v805
        %838 = vst [vmem:[%s278 + $0x10] sm:$0xff] %v806
        %839 = vst [vmem:[%s278 + $0x18] sm:$0xff] %v807
        %840 = vst [vmem:[%s278 + $0x20] sm:$0xff] %v808
        %841 = vst [vmem:[%s278 + $0x28] sm:$0xff] %v809
        %842 = vst [vmem:[%s278 + $0x30] sm:$0xff] %v810
        %843 = vst [vmem:[%s278 + $0x38] sm:$0xff] %v811
        %844 = vst [vmem:[%s278 + $0x40] sm:$0xff] %v812
        %845 = vst [vmem:[%s278 + $0x48] sm:$0xff] %v813
        %846 = vst [vmem:[%s278 + $0x50] sm:$0xff] %v814
        %847 = vst [vmem:[%s278 + $0x58] sm:$0xff] %v815
        %848 = vst [vmem:[%s278 + $0x60] sm:$0xff] %v816
        %849 = vst [vmem:[%s278 + $0x68] sm:$0xff] %v817
        %850 = vst [vmem:[%s278 + $0x70] sm:$0xff] %v818
        %851 = vst [vmem:[%s278 + $0x78] sm:$0xff] %v819
        %852 = vst [vmem:[%s278 + $0x80] sm:$0xff] %v820
        %853 = vst [vmem:[%s278 + $0x88] sm:$0xff] %v821
        %854 = vst [vmem:[%s278 + $0x90] sm:$0xff] %v822
        %855 = vst [vmem:[%s278 + $0x98] sm:$0xff] %v823
        %856 = vst [vmem:[%s278 + $0xa0] sm:$0xff] %v824
        %857 = vst [vmem:[%s278 + $0xa8] sm:$0xff] %v825
        %858 = vst [vmem:[%s278 + $0xb0] sm:$0xff] %v826
        %859 = vst [vmem:[%s278 + $0xb8] sm:$0xff] %v827
        %860 = vst [vmem:[%s278 + $0xc0] sm:$0xff] %v828
        %861 = vst [vmem:[%s278 + $0xc8] sm:$0xff] %v829
        %862 = vst [vmem:[%s278 + $0xd0] sm:$0xff] %v830
        %863 = vst [vmem:[%s278 + $0xd8] sm:$0xff] %v831
        %864 = vst [vmem:[%s278 + $0xe0] sm:$0xff] %v832
        %865 = vst [vmem:[%s278 + $0xe8] sm:$0xff] %v833
        %866 = vst [vmem:[%s278 + $0xf0] sm:$0xff] %v834
        %867 = vst [vmem:[%s278 + $0xf8] sm:$0xff] %v835
        %s868 = sand.u32 %s145, 1
        %s869 = scalar_lea.sflag [#allocation4], %s868
        %s870 = sand.u32 %s145, 1
        %s871 = smul.addr %s870, 32
        %s872 = scalar_lea.vmem [#allocation5], %s871
        %s873 = sand.u32 %s171, 1
        %s874 = scalar_lea.sflag [#allocation7], %s873
        %s875 = sand.u32 %s171, 1
        %s876 = smul.addr %s875, 256
        %s877 = scalar_lea.vmem [#allocation6], %s876
        // Predicated region
        $region45: #{tpu_custom_call.1} parent=39 // pred_check
          %p878 = pneg %p155
        $region46: #{tpu_custom_call.1} parent=39 // pred_check_branch
          %880 = sbr.rel (%p878) target = $region48
        $region47: #{tpu_custom_call.1} parent=39 // pred_region
          %s882 = ssub.s32 512, 512
          %883 = vsyncadd %s869, %s882
          %s884 = smul.addr %s27, 8
          %s885 = smul.addr %s884, 64
          %s886 = scalar_lea.hbm %s5, %s885
          %s888 = sshll.u32 %s872, 4
          %s889 = int_to_ptr.vmem [resolvable:$true] %s888
          %891 = dma.vmem_to_hbm [thread:$0]  %s889, 512, %s886, %s869
        $region48: #{tpu_custom_call.1} parent=39 // pred_fallthru
          _
        // Predicated region
        $region49: #{tpu_custom_call.1} parent=39 // pred_check
          %p892 = pneg %p181
        $region50: #{tpu_custom_call.1} parent=39 // pred_check_branch
          %894 = sbr.rel (%p892) target = $region52
        $region51: #{tpu_custom_call.1} parent=39 // pred_region
          %s896 = ssub.s32 4096, 4096
          %897 = vsyncadd %s874, %s896
          %s898 = smul.addr %s27, 32
          %s899 = smul.addr %s898, 128
          %s900 = scalar_lea.hbm %s6, %s899
          %s901 = sshll.u32 %s877, 4
          %s902 = int_to_ptr.vmem [resolvable:$true] %s901
          %907 = dma.vmem_to_hbm [thread:$0]  %s902, 4096, %s900, %s874, 1024, 1024, 64
        $region52: #{tpu_custom_call.1} parent=39 // pred_fallthru
          _
      $region40: #{tpu_custom_call.1} parent=5 // pred_fallthru
        _
      %p908 = scmp.le.s32.totalorder 2, %s22
      // Predicated region
      $region53: #{tpu_custom_call.1} parent=5 // pred_check
        %p909 = pneg %p908
      $region54: #{tpu_custom_call.1} parent=5 // pred_check_branch
        %911 = sbr.rel (%p909) target = $region56
      $region55: #{tpu_custom_call.1} parent=5 // pred_region
        %s912 = ssub.s32 %s22, 2
        // Predicated region
        $region57: #{tpu_custom_call.1} parent=55 // pred_check
          %p913 = pneg %p161
        $region58: #{tpu_custom_call.1} parent=55 // pred_check_branch
          %915 = sbr.rel (%p913) target = $region60
        $region59: #{tpu_custom_call.1} parent=55 // pred_region
          %s916 = sand.u32 %s146, 1
          %s917 = scalar_lea.sflag [#allocation4], %s916
          %s918 = sand.u32 %s146, 1
          %s919 = smul.addr %s918, 32
          %s920 = scalar_lea.vmem [#allocation5], %s919
          %921 = dma.done %s917, 512
        $region60: #{tpu_custom_call.1} parent=55 // pred_fallthru
          _
        // Predicated region
        $region61: #{tpu_custom_call.1} parent=55 // pred_check
          %p922 = pneg %p187
        $region62: #{tpu_custom_call.1} parent=55 // pred_check_branch
          %924 = sbr.rel (%p922) target = $region64
        $region63: #{tpu_custom_call.1} parent=55 // pred_region
          %s925 = sand.u32 %s172, 1
          %s926 = scalar_lea.sflag [#allocation7], %s925
          %s927 = sand.u32 %s172, 1
          %s928 = smul.addr %s927, 256
          %s929 = scalar_lea.vmem [#allocation6], %s928
          %930 = dma.done %s926, 4096
        $region64: #{tpu_custom_call.1} parent=55 // pred_fallthru
          _
      $region56: #{tpu_custom_call.1} parent=5 // pred_fallthru
        _
    $region6: #{tpu_custom_call.1} parent=1 // loop_footer
      %s26 = sadd.s32 1, %s22
    $region7: #{tpu_custom_call.1} parent=1 // loop_footer_branch
      %21 = sbr.rel target = $region3
    $region8: #{tpu_custom_call.1} parent=1 // loop_exit
      _
    %931 = vsyncpa [#allocation3], 1
    %s932 = scalar_lea.sflag [#allocation3], 1
    %933 = vsyncpa %s932, 1
    %934 = vsyncpa [#allocation4], 1
    %s935 = scalar_lea.sflag [#allocation4], 1
    %936 = vsyncpa %s935, 1
    %937 = vsyncpa [#allocation7], 1
    %s938 = scalar_lea.sflag [#allocation7], 1
    %939 = vsyncpa %s938, 1

</llo_original>
